<compile_context>
chip_gen: v7x
topology: tpu7x:2x2x1
jax: 0.10.0
libtpu: 0.0.40
codegen_flags: <defaults>
</compile_context>

<pallas_src>
import functools

import jax
import jax.numpy as jnp
from jax import lax
from jax.experimental import pallas as pl
from jax.experimental.pallas import tpu as pltpu


def _cti_kernel(*refs, scale, eps, num_heads, mm_dtype):
    if num_heads > 1:
        (fea_ref, ctr_ref, wq_ref, wk_ref, wv_ref, wproj_ref, hmix_ref,
         bproj_ref, gamma_ref, beta_ref, out_ref) = refs
    else:
        (fea_ref, ctr_ref, wq_ref, wk_ref, wv_ref, wproj_ref,
         bproj_ref, gamma_ref, beta_ref, out_ref) = refs
        hmix_ref = None

    tb, n, c = fea_ref.shape
    nb = n - 2                      # bulk (= output) tokens per batch element
    rows = tb * nb

    gamma = gamma_ref[...]          # (1, c) f32
    beta = beta_ref[...]

    def layer_norm(x):              # two-pass, biased variance (matches torch)
        mean = jnp.mean(x, axis=-1, keepdims=True)
        d = x - mean
        var = jnp.mean(d * d, axis=-1, keepdims=True)
        return d * lax.rsqrt(var + eps)

    # ---- bulk tokens 1..n-2: LayerNorm + q projection (one big MXU matmul) --
    # Token 0 is dropped right after the load (never used by the reference).
    fea = fea_ref[...].astype(jnp.float32)              # (tb, n, c)
    xb_raw = fea[:, 1:n - 1, :]                         # (tb, nb, c)  residual
    xb = layer_norm(xb_raw) * gamma + beta
    # NOTE: collapsing (tb, nb) is a pure vreg re-tiling when nb % 8 == 0.
    xb2 = xb.reshape(rows, c).astype(mm_dtype)
    q = jnp.dot(xb2, wq_ref[...], preferred_element_type=jnp.float32)

    # ---- contour token (own squeezed block): k/v on tb rows only -----------
    xc = layer_norm(ctr_ref[...].astype(jnp.float32)) * gamma + beta   # (tb, c)
    xc = xc.astype(mm_dtype)
    k = jnp.dot(xc, wk_ref[...], preferred_element_type=jnp.float32)   # (tb, c)
    v = jnp.dot(xc, wv_ref[...], preferred_element_type=jnp.float32)   # (tb, c)

    # ---- broadcast k/v to every bulk row of its batch element via the MXU --
    # expand[r, b] = 1 iff row r belongs to batch element b (r // nb == b).
    # A tiny 0/1 matmul keeps everything 2-D: no sublane relayouts, and the
    # MXU has plenty of slack in this kernel.
    r_id = lax.broadcasted_iota(jnp.int32, (rows, tb), 0)
    b_lo = lax.broadcasted_iota(jnp.int32, (rows, tb), 1) * nb
    expand = ((r_id >= b_lo) & (r_id < b_lo + nb)).astype(mm_dtype)
    k_rep = jnp.dot(expand, k.astype(mm_dtype),
                    preferred_element_type=jnp.float32)                # (rows, c)
    v_rep = jnp.dot(expand, v.astype(mm_dtype),
                    preferred_element_type=jnp.float32)                # (rows, c)

    # ---- per-head attention logits against the single contour token --------
    qk = q * k_rep                                                     # (rows, c)
    if num_heads > 1:
        # block-diagonal 0/1 "same head" indicator -> per-head reduce+broadcast
        logits = jnp.dot(qk.astype(mm_dtype), hmix_ref[...].astype(mm_dtype),
                         preferred_element_type=jnp.float32)           # (rows, c)
    else:
        logits = jnp.sum(qk, axis=-1, keepdims=True)                   # (rows, 1)
    attn = jax.nn.sigmoid(logits * scale)          # attn_drop = identity (p=0)
    infer = attn * v_rep                                               # (rows, c)

    # ---- output projection + bias + residual; store starts at sublane 0 ----
    proj = jnp.dot(infer.astype(mm_dtype), wproj_ref[...],
                   preferred_element_type=jnp.float32) + bproj_ref[...]
    out_ref[...] = (proj.reshape(tb, nb, c) + xb_raw).astype(out_ref.dtype)


def contour_token_inference(fea, params, *, num_heads=1, qk_scale=None,
                            eps=1e-5, block_b=None, use_bf16_matmul=False):
    """fea: (B, N, C).  Returns (B, N-2, C), matching the PyTorch module."""
    B, N, C = fea.shape
    assert N >= 3, "need front tokens plus a contour token"
    assert C % num_heads == 0, "C must be divisible by num_heads"
    head_dim = C // num_heads
    scale = float(qk_scale) if qk_scale is not None else head_dim ** (-0.5)

    # ---- generation-aware VMEM budget (v7x: 64 MiB phys; v5e/v6e: 128 MiB) --
    try:
        phys_vmem = int(pltpu.get_tpu_info().vmem_capacity_bytes)
    except Exception:
        phys_vmem = 64 * 1024 * 1024          # conservative fallback (v7x floor)
    budget = max(16 * 1024 * 1024,
                 min(int(phys_vmem * 0.85), phys_vmem - 8 * 1024 * 1024))

    # Matmul operand dtype: f32 by default (tight tolerances), bf16 opt-in for
    # v6e/v7x MXU rate; forced when double-buffered f32 weights would not fit
    # the VMEM budget (v7x, large C).  Accumulation is f32 either way.
    mm_dtype = jnp.bfloat16 if use_bf16_matmul else jnp.float32
    if mm_dtype == jnp.float32 and 2 * (4 * C * C) * 4 > budget // 2:
        mm_dtype = jnp.bfloat16               # large-C guard (v7x 64 MiB VMEM)

    act_isz = jnp.dtype(fea.dtype).itemsize
    w_isz = jnp.dtype(mm_dtype).itemsize

    def est_vmem(tb_):
        rows = tb_ * (N - 2)
        io = 2 * tb_ * N * C * act_isz            # fea double buffer
        io += 2 * tb_ * C * act_isz               # contour-row double buffer
        io += 2 * tb_ * (N - 2) * C * act_isz     # out double buffer
        wts = 2 * 4 * C * C * w_isz               # wq/wk/wv/wproj, double-buffered
        wts += (2 * C * C * 2) if num_heads > 1 else 0          # hmix (bf16)
        wts += 2 * 3 * C * 4                      # bproj / gamma / beta
        tmp = (tb_ * N + 10 * rows) * C * 4 + rows * tb_ * 4    # f32 temporaries
        return io + wts + tmp

    # ---- batch tile: ~1024 LHS rows/step, VMEM-bounded, >=2 steps, even -----
    if block_b is None:
        tb = max(1, min(B, max(1, 1024 // max(N, 1))))
        while tb > 1 and est_vmem(tb) > int(0.9 * budget):
            tb = (tb + 1) // 2
        if B > 1:
            tb = min(tb, (B + 1) // 2)            # >= 2 grid steps (v7x megacore)
        steps = -(-B // tb)
        if steps > 1 and steps % 2 == 1:          # prefer an even step count
            tb2 = -(-B // (steps + 1))
            if tb2 >= 1 and (-(-B // tb2)) % 2 == 0:
                tb = tb2
    else:
        tb = max(1, min(B, int(block_b)))
    n_steps = -(-B // tb)
    Bp = n_steps * tb
    pad_b = Bp - B

    # ---- host-side parameter prep (transpose only; no channel padding) ------
    def t32(w):                                   # torch (out, in) -> (in, out)
        return jnp.asarray(w, jnp.float32).T

    wq = t32(params["wq"]).astype(mm_dtype)                         # (C, C)
    wk = t32(params["wk"]).astype(mm_dtype)                         # (C, C)
    wv = t32(params["wv"]).astype(mm_dtype)                         # (C, C)
    wproj = t32(params["wproj"]).astype(mm_dtype)                   # (C, C)
    bproj = jnp.asarray(params["bproj"], jnp.float32).reshape(1, C)
    gamma = jnp.asarray(params["gamma"], jnp.float32).reshape(1, C)
    beta = jnp.asarray(params["beta"], jnp.float32).reshape(1, C)

    fea_p = jnp.pad(fea, ((0, pad_b), (0, 0), (0, 0))) if pad_b else fea
    ctr_p = fea_p[:, N - 1:N, :]                  # (Bp, 1, C) contour-token rows

    const2 = lambda b: (0, 0)
    in_specs = [
        pl.BlockSpec((tb, N, C), lambda b: (b, 0, 0)),       # fea block
        pl.BlockSpec((tb, None, C), lambda b: (b, 0, 0)),    # contour rows -> (tb, C)
        pl.BlockSpec((C, C), const2),                        # wq^T   (grid-invariant)
        pl.BlockSpec((C, C), const2),                        # wk^T
        pl.BlockSpec((C, C), const2),                        # wv^T
        pl.BlockSpec((C, C), const2),                        # wproj^T
    ]
    args = [fea_p, ctr_p, wq, wk, wv, wproj]
    if num_heads > 1:
        head = jnp.arange(C) // head_dim
        hmix = (head[:, None] == head[None, :]).astype(jnp.bfloat16)  # exact 0/1
        in_specs.append(pl.BlockSpec((C, C), const2))
        args.append(hmix)
    in_specs += [pl.BlockSpec((1, C), const2)] * 3            # bproj, gamma, beta
    args += [bproj, gamma, beta]

    kernel = functools.partial(_cti_kernel, scale=scale, eps=eps,
                               num_heads=num_heads, mm_dtype=mm_dtype)

    out = pl.pallas_call(
        kernel,
        out_shape=jax.ShapeDtypeStruct((Bp, N - 2, C), fea.dtype),
        grid_spec=pltpu.PrefetchScalarGridSpec(
            num_scalar_prefetch=0,
            grid=(n_steps,),
            in_specs=in_specs,
            out_specs=pl.BlockSpec((tb, N - 2, C), lambda b: (b, 0, 0)),
        ),
        compiler_params=pltpu.CompilerParams(
            dimension_semantics=("parallel",),
            vmem_limit_bytes=int(budget)),
    )(*args)

    return out if pad_b == 0 else out[:B]


def _reference(fea, params, *, num_heads=1, qk_scale=None, eps=1e-5):
    """Pure-JAX reference mirroring the PyTorch forward."""
    B, N, C = fea.shape
    head_dim = C // num_heads
    scale = qk_scale if qk_scale is not None else head_dim ** (-0.5)

    mean = jnp.mean(fea, axis=-1, keepdims=True)
    var = jnp.mean((fea - mean) ** 2, axis=-1, keepdims=True)
    x = (fea - mean) / jnp.sqrt(var + eps) * params["gamma"] + params["beta"]

    T_s = x[:, -1:, :]
    F_s = x[:, 1:-1, :]
    q = F_s @ params["wq"].T
    k = T_s @ params["wk"].T
    v = T_s @ params["wv"].T
    q = q.reshape(B, N - 2, num_heads, head_dim).transpose(0, 2, 1, 3)
    k = k.reshape(B, 1, num_heads, head_dim).transpose(0, 2, 1, 3)
    v = v.reshape(B, 1, num_heads, head_dim).transpose(0, 2, 1, 3)
    attn = jax.nn.sigmoid((q @ jnp.swapaxes(k, -2, -1)) * scale)
    out = (attn @ v).transpose(0, 2, 1, 3).reshape(B, N - 2, C)
    out = out @ params["wproj"].T + params["bproj"]
    return out + fea[:, 1:-1, :]


if __name__ == "__main__":
    def run_case(case_id, B, N, C, num_heads, random_affine):
        key = jax.random.fold_in(jax.random.PRNGKey(0), case_id)
        ks = jax.random.split(key, 8)
        fea = jax.random.normal(ks[0], (B, N, C), dtype=jnp.float32)
        s = 0.05
        gamma = (1.0 + 0.1 * jax.random.normal(ks[6], (C,), jnp.float32)
                 if random_affine else jnp.ones((C,), jnp.float32))
        beta = (0.1 * jax.random.normal(ks[7], (C,), jnp.float32)
                if random_affine else jnp.zeros((C,), jnp.float32))
        params = {
            "wq": s * jax.random.normal(ks[1], (C, C), jnp.float32),
            "wk": s * jax.random.normal(ks[2], (C, C), jnp.float32),
            "wv": s * jax.random.normal(ks[3], (C, C), jnp.float32),
            "wproj": s * jax.random.normal(ks[4], (C, C), jnp.float32),
            "bproj": s * jax.random.normal(ks[5], (C,), jnp.float32),
            "gamma": gamma,
            "beta": beta,
        }
        out = contour_token_inference(fea, params, num_heads=num_heads)
        out = jax.block_until_ready(out)
        ref = _reference(fea, params, num_heads=num_heads)
        assert out.shape == (B, N - 2, C)
        assert jnp.allclose(out, ref, atol=1e-4, rtol=1e-4), (
            f"mismatch vs reference (B={B}, N={N}, C={C}, H={num_heads})")

    # N - 2 kept a multiple of 8 so the in-kernel (tb, N-2, C) <-> (tb*(N-2), C)
    # reshapes are pure vreg re-tilings (no sublane relayout).
    # single head (module defaults), even batch -> 2 balanced grid steps
    run_case(0, B=4, N=10, C=32, num_heads=1, random_affine=False)
    # multi-head + odd batch (exercises hmix path and batch-tile padding)
    run_case(1, B=3, N=10, C=64, num_heads=4, random_affine=True)

    print("KERNEL_OK")
</pallas_src>

<mosaic_0001>
module attributes {stable_mosaic.version = 11 : i64} {
  func.func @_cti_kernel(%arg0: i32, %arg1: memref<2x10x32xf32, #tpu.memory_space<vmem>>, %arg2: memref<2x1x32xf32, #tpu.memory_space<vmem>>, %arg3: memref<32x32xf32, #tpu.memory_space<vmem>>, %arg4: memref<32x32xf32, #tpu.memory_space<vmem>>, %arg5: memref<32x32xf32, #tpu.memory_space<vmem>>, %arg6: memref<32x32xf32, #tpu.memory_space<vmem>>, %arg7: memref<1x32xf32, #tpu.memory_space<vmem>>, %arg8: memref<1x32xf32, #tpu.memory_space<vmem>>, %arg9: memref<1x32xf32, #tpu.memory_space<vmem>>, %arg10: memref<2x8x32xf32, #tpu.memory_space<vmem>>) attributes {dimension_semantics = [#tpu.dimension_semantics<parallel>], iteration_bounds = array<i64: 2>, scalar_prefetch = 0 : i64, scratch_operands = 0 : i64, tpu.core_type = #tpu.core_type<tc>, window_params = [{transform_indices = @transform_0, window_bounds = array<i64: 2, 10, 32>}, {transform_indices = @transform_1, window_bounds = array<i64: 2, 1, 32>}, {pipeline_mode = #tpu.pipeline_mode<synchronous>, transform_indices = @transform_2, window_bounds = array<i64: 32, 32>}, {pipeline_mode = #tpu.pipeline_mode<synchronous>, transform_indices = @transform_3, window_bounds = array<i64: 32, 32>}, {pipeline_mode = #tpu.pipeline_mode<synchronous>, transform_indices = @transform_4, window_bounds = array<i64: 32, 32>}, {pipeline_mode = #tpu.pipeline_mode<synchronous>, transform_indices = @transform_5, window_bounds = array<i64: 32, 32>}, {pipeline_mode = #tpu.pipeline_mode<synchronous>, transform_indices = @transform_6, window_bounds = array<i64: 1, 32>}, {pipeline_mode = #tpu.pipeline_mode<synchronous>, transform_indices = @transform_7, window_bounds = array<i64: 1, 32>}, {pipeline_mode = #tpu.pipeline_mode<synchronous>, transform_indices = @transform_8, window_bounds = array<i64: 1, 32>}, {transform_indices = @transform_9, window_bounds = array<i64: 2, 8, 32>}]} {
    %c0 = arith.constant 0 : index
    %c0_0 = arith.constant 0 : index
    %0 = vector.load %arg8[%c0, %c0_0] : memref<1x32xf32, #tpu.memory_space<vmem>>, vector<1x32xf32>
    %c0_1 = arith.constant 0 : index
    %c0_2 = arith.constant 0 : index
    %1 = vector.load %arg9[%c0_1, %c0_2] : memref<1x32xf32, #tpu.memory_space<vmem>>, vector<1x32xf32>
    %c0_3 = arith.constant 0 : index
    %c0_4 = arith.constant 0 : index
    %c0_5 = arith.constant 0 : index
    %2 = vector.load %arg1[%c0_3, %c0_4, %c0_5] : memref<2x10x32xf32, #tpu.memory_space<vmem>>, vector<2x10x32xf32>
    %3 = vector.extract_strided_slice %2 {offsets = [0, 1, 0], sizes = [2, 8, 32], strides = [1, 1, 1]} : vector<2x10x32xf32> to vector<2x8x32xf32>
    %cst = arith.constant dense<0.000000e+00> : vector<2x8xf32>
    %4 = vector.multi_reduction <add>, %3, %cst [2] : vector<2x8x32xf32> to vector<2x8xf32>
    %5 = vector.shape_cast %4 : vector<2x8xf32> to vector<2x8x1xf32>
    %cst_6 = arith.constant 3.200000e+01 : f32
    %6 = vector.broadcast %cst_6 : f32 to vector<2x8x1xf32>
    %7 = arith.divf %5, %6 : vector<2x8x1xf32>
    %8 = vector.broadcast %7 : vector<2x8x1xf32> to vector<2x8x32xf32>
    %9 = arith.subf %3, %8 : vector<2x8x32xf32>
    %10 = arith.mulf %9, %9 : vector<2x8x32xf32>
    %cst_7 = arith.constant dense<0.000000e+00> : vector<2x8xf32>
    %11 = vector.multi_reduction <add>, %10, %cst_7 [2] : vector<2x8x32xf32> to vector<2x8xf32>
    %12 = vector.shape_cast %11 : vector<2x8xf32> to vector<2x8x1xf32>
    %cst_8 = arith.constant 3.200000e+01 : f32
    %13 = vector.broadcast %cst_8 : f32 to vector<2x8x1xf32>
    %14 = arith.divf %12, %13 : vector<2x8x1xf32>
    %cst_9 = arith.constant 9.99999974E-6 : f32
    %15 = vector.broadcast %cst_9 : f32 to vector<2x8x1xf32>
    %16 = arith.addf %14, %15 : vector<2x8x1xf32>
    %17 = math.rsqrt %16 : vector<2x8x1xf32>
    %18 = vector.broadcast %17 : vector<2x8x1xf32> to vector<2x8x32xf32>
    %19 = arith.mulf %9, %18 : vector<2x8x32xf32>
    %20 = vector.shape_cast %0 : vector<1x32xf32> to vector<1x1x32xf32>
    %21 = vector.broadcast %20 : vector<1x1x32xf32> to vector<2x8x32xf32>
    %22 = arith.mulf %19, %21 : vector<2x8x32xf32>
    %23 = vector.shape_cast %1 : vector<1x32xf32> to vector<1x1x32xf32>
    %24 = vector.broadcast %23 : vector<1x1x32xf32> to vector<2x8x32xf32>
    %25 = arith.addf %22, %24 : vector<2x8x32xf32>
    %26 = vector.shape_cast %25 : vector<2x8x32xf32> to vector<16x32xf32>
    %c0_10 = arith.constant 0 : index
    %c0_11 = arith.constant 0 : index
    %27 = vector.load %arg3[%c0_10, %c0_11] : memref<32x32xf32, #tpu.memory_space<vmem>>, vector<32x32xf32>
    %cst_12 = arith.constant dense<0.000000e+00> : vector<16x32xf32>
    %28 = tpu.matmul %26, %27, %cst_12 {dimension_numbers = #tpu.dot_dimension_numbers<[1], [0], [0], [1], [0, 0, 1, 1], [], []>} : vector<16x32xf32>, vector<32x32xf32>, vector<16x32xf32> -> vector<16x32xf32>
    %c0_13 = arith.constant 0 : index
    %c0_14 = arith.constant 0 : index
    %c0_15 = arith.constant 0 : index
    %29 = vector.load %arg2[%c0_13, %c0_14, %c0_15] : memref<2x1x32xf32, #tpu.memory_space<vmem>>, vector<2x1x32xf32>
    %30 = vector.shape_cast %29 : vector<2x1x32xf32> to vector<2x32xf32>
    %cst_16 = arith.constant dense<0.000000e+00> : vector<2xf32>
    %31 = vector.multi_reduction <add>, %30, %cst_16 [1] : vector<2x32xf32> to vector<2xf32>
    %32 = vector.shape_cast %31 : vector<2xf32> to vector<2x1xf32>
    %cst_17 = arith.constant 3.200000e+01 : f32
    %33 = vector.broadcast %cst_17 : f32 to vector<2x1xf32>
    %34 = arith.divf %32, %33 : vector<2x1xf32>
    %35 = vector.broadcast %34 : vector<2x1xf32> to vector<2x32xf32>
    %36 = arith.subf %30, %35 : vector<2x32xf32>
    %37 = arith.mulf %36, %36 : vector<2x32xf32>
    %cst_18 = arith.constant dense<0.000000e+00> : vector<2xf32>
    %38 = vector.multi_reduction <add>, %37, %cst_18 [1] : vector<2x32xf32> to vector<2xf32>
    %39 = vector.shape_cast %38 : vector<2xf32> to vector<2x1xf32>
    %cst_19 = arith.constant 3.200000e+01 : f32
    %40 = vector.broadcast %cst_19 : f32 to vector<2x1xf32>
    %41 = arith.divf %39, %40 : vector<2x1xf32>
    %cst_20 = arith.constant 9.99999974E-6 : f32
    %42 = vector.broadcast %cst_20 : f32 to vector<2x1xf32>
    %43 = arith.addf %41, %42 : vector<2x1xf32>
    %44 = math.rsqrt %43 : vector<2x1xf32>
    %45 = vector.broadcast %44 : vector<2x1xf32> to vector<2x32xf32>
    %46 = arith.mulf %36, %45 : vector<2x32xf32>
    %47 = vector.broadcast %0 : vector<1x32xf32> to vector<2x32xf32>
    %48 = arith.mulf %46, %47 : vector<2x32xf32>
    %49 = vector.broadcast %1 : vector<1x32xf32> to vector<2x32xf32>
    %50 = arith.addf %48, %49 : vector<2x32xf32>
    %c0_21 = arith.constant 0 : index
    %c0_22 = arith.constant 0 : index
    %51 = vector.load %arg4[%c0_21, %c0_22] : memref<32x32xf32, #tpu.memory_space<vmem>>, vector<32x32xf32>
    %cst_23 = arith.constant dense<0.000000e+00> : vector<2x32xf32>
    %52 = tpu.matmul %50, %51, %cst_23 {dimension_numbers = #tpu.dot_dimension_numbers<[1], [0], [0], [1], [0, 0, 1, 1], [], []>} : vector<2x32xf32>, vector<32x32xf32>, vector<2x32xf32> -> vector<2x32xf32>
    %c0_24 = arith.constant 0 : index
    %c0_25 = arith.constant 0 : index
    %53 = vector.load %arg5[%c0_24, %c0_25] : memref<32x32xf32, #tpu.memory_space<vmem>>, vector<32x32xf32>
    %cst_26 = arith.constant dense<0.000000e+00> : vector<2x32xf32>
    %54 = tpu.matmul %50, %53, %cst_26 {dimension_numbers = #tpu.dot_dimension_numbers<[1], [0], [0], [1], [0, 0, 1, 1], [], []>} : vector<2x32xf32>, vector<32x32xf32>, vector<2x32xf32> -> vector<2x32xf32>
    %55 = tpu.iota {dimensions = array<i32: 0>} : vector<16x2xi32>
    %56 = tpu.iota {dimensions = array<i32: 1>} : vector<16x2xi32>
    %c8_i32 = arith.constant 8 : i32
    %57 = vector.broadcast %c8_i32 : i32 to vector<16x2xi32>
    %58 = arith.muli %56, %57 : vector<16x2xi32>
    %59 = arith.cmpi sge, %55, %58 : vector<16x2xi32>
    %c8_i32_27 = arith.constant 8 : i32
    %60 = vector.broadcast %c8_i32_27 : i32 to vector<16x2xi32>
    %61 = arith.addi %58, %60 : vector<16x2xi32>
    %62 = arith.cmpi slt, %55, %61 : vector<16x2xi32>
    %63 = arith.andi %59, %62 : vector<16x2xi1>
    %64 = arith.extui %63 : vector<16x2xi1> to vector<16x2xi32>
    %65 = arith.sitofp %64 : vector<16x2xi32> to vector<16x2xf32>
    %cst_28 = arith.constant dense<0.000000e+00> : vector<16x32xf32>
    %66 = tpu.matmul %65, %52, %cst_28 {dimension_numbers = #tpu.dot_dimension_numbers<[1], [0], [0], [1], [0, 0, 1, 1], [], []>} : vector<16x2xf32>, vector<2x32xf32>, vector<16x32xf32> -> vector<16x32xf32>
    %cst_29 = arith.constant dense<0.000000e+00> : vector<16x32xf32>
    %67 = tpu.matmul %65, %54, %cst_29 {dimension_numbers = #tpu.dot_dimension_numbers<[1], [0], [0], [1], [0, 0, 1, 1], [], []>} : vector<16x2xf32>, vector<2x32xf32>, vector<16x32xf32> -> vector<16x32xf32>
    %68 = arith.mulf %28, %66 : vector<16x32xf32>
    %cst_30 = arith.constant dense<0.000000e+00> : vector<16xf32>
    %69 = vector.multi_reduction <add>, %68, %cst_30 [1] : vector<16x32xf32> to vector<16xf32>
    %70 = vector.shape_cast %69 : vector<16xf32> to vector<16x1xf32>
    %cst_31 = arith.constant 0.176776692 : f32
    %71 = vector.broadcast %cst_31 : f32 to vector<16x1xf32>
    %72 = arith.mulf %70, %71 : vector<16x1xf32>
    %73 = arith.negf %72 : vector<16x1xf32>
    %74 = math.exp %73 : vector<16x1xf32>
    %cst_32 = arith.constant 1.000000e+00 : f32
    %75 = vector.broadcast %cst_32 : f32 to vector<16x1xf32>
    %76 = arith.addf %75, %74 : vector<16x1xf32>
    %77 = arith.divf %75, %76 : vector<16x1xf32>
    %78 = vector.broadcast %77 : vector<16x1xf32> to vector<16x32xf32>
    %79 = arith.mulf %78, %67 : vector<16x32xf32>
    %c0_33 = arith.constant 0 : index
    %c0_34 = arith.constant 0 : index
    %80 = vector.load %arg6[%c0_33, %c0_34] : memref<32x32xf32, #tpu.memory_space<vmem>>, vector<32x32xf32>
    %cst_35 = arith.constant dense<0.000000e+00> : vector<16x32xf32>
    %81 = tpu.matmul %79, %80, %cst_35 {dimension_numbers = #tpu.dot_dimension_numbers<[1], [0], [0], [1], [0, 0, 1, 1], [], []>} : vector<16x32xf32>, vector<32x32xf32>, vector<16x32xf32> -> vector<16x32xf32>
    %c0_36 = arith.constant 0 : index
    %c0_37 = arith.constant 0 : index
    %82 = vector.load %arg7[%c0_36, %c0_37] : memref<1x32xf32, #tpu.memory_space<vmem>>, vector<1x32xf32>
    %83 = vector.broadcast %82 : vector<1x32xf32> to vector<16x32xf32>
    %84 = arith.addf %81, %83 : vector<16x32xf32>
    %85 = vector.shape_cast %84 : vector<16x32xf32> to vector<2x8x32xf32>
    %86 = arith.addf %85, %3 : vector<2x8x32xf32>
    %c0_38 = arith.constant 0 : index
    %c0_39 = arith.constant 0 : index
    %c0_40 = arith.constant 0 : index
    %87 = vector.load %arg10[%c0_38, %c0_39, %c0_40] : memref<2x8x32xf32, #tpu.memory_space<vmem>>, vector<2x8x32xf32>
    tpu.vector_store %arg10[%c0_38, %c0_39, %c0_40], %86 {strides = array<i32>} : memref<2x8x32xf32, #tpu.memory_space<vmem>>, vector<2x8x32xf32>,
    return
  }
  func.func @transform_0(%arg0: i32) -> (i32, i32, i32) {
    %c0_i32 = arith.constant 0 : i32
    %c0_i32_0 = arith.constant 0 : i32
    %c0_i32_1 = arith.constant 0 : i32
    return %arg0, %c0_i32, %c0_i32_0 : i32, i32, i32
  }
  func.func @transform_1(%arg0: i32) -> (i32, i32, i32) {
    %c0_i32 = arith.constant 0 : i32
    %c0_i32_0 = arith.constant 0 : i32
    %c0_i32_1 = arith.constant 0 : i32
    return %arg0, %c0_i32, %c0_i32_0 : i32, i32, i32
  }
  func.func @transform_2(%arg0: i32) -> (i32, i32) {
    %c0_i32 = arith.constant 0 : i32
    %c0_i32_0 = arith.constant 0 : i32
    %c0_i32_1 = arith.constant 0 : i32
    return %c0_i32, %c0_i32_0 : i32, i32
  }
  func.func @transform_3(%arg0: i32) -> (i32, i32) {
    %c0_i32 = arith.constant 0 : i32
    %c0_i32_0 = arith.constant 0 : i32
    %c0_i32_1 = arith.constant 0 : i32
    return %c0_i32, %c0_i32_0 : i32, i32
  }
  func.func @transform_4(%arg0: i32) -> (i32, i32) {
    %c0_i32 = arith.constant 0 : i32
    %c0_i32_0 = arith.constant 0 : i32
    %c0_i32_1 = arith.constant 0 : i32
    return %c0_i32, %c0_i32_0 : i32, i32
  }
  func.func @transform_5(%arg0: i32) -> (i32, i32) {
    %c0_i32 = arith.constant 0 : i32
    %c0_i32_0 = arith.constant 0 : i32
    %c0_i32_1 = arith.constant 0 : i32
    return %c0_i32, %c0_i32_0 : i32, i32
  }
  func.func @transform_6(%arg0: i32) -> (i32, i32) {
    %c0_i32 = arith.constant 0 : i32
    %c0_i32_0 = arith.constant 0 : i32
    %c0_i32_1 = arith.constant 0 : i32
    return %c0_i32, %c0_i32_0 : i32, i32
  }
  func.func @transform_7(%arg0: i32) -> (i32, i32) {
    %c0_i32 = arith.constant 0 : i32
    %c0_i32_0 = arith.constant 0 : i32
    %c0_i32_1 = arith.constant 0 : i32
    return %c0_i32, %c0_i32_0 : i32, i32
  }
  func.func @transform_8(%arg0: i32) -> (i32, i32) {
    %c0_i32 = arith.constant 0 : i32
    %c0_i32_0 = arith.constant 0 : i32
    %c0_i32_1 = arith.constant 0 : i32
    return %c0_i32, %c0_i32_0 : i32, i32
  }
  func.func @transform_9(%arg0: i32) -> (i32, i32, i32) {
    %c0_i32 = arith.constant 0 : i32
    %c0_i32_0 = arith.constant 0 : i32
    %c0_i32_1 = arith.constant 0 : i32
    return %arg0, %c0_i32, %c0_i32_0 : i32, i32, i32
  }
}

</mosaic_0001>

<llo_original>
// kernel: tpu_custom_call.1
$region0: #{tpu_custom_call.1}
  #allocation0 [shape = 'u32[]', space=smem, size = 0x4, offset = 0x4, fixed_abs, tag = 'smem constant byte address 0x4 - core index']
  #allocation1 [shape = 'u32[144,128]{1,0:T(1,128)}', space=vmem, size = 0x12000, scoped, tag = 'internal scratch']
  %s0 = inlined_call_operand.vmem [shape: f32[4,10,32], index: 0, kind: input, shape index: {}]
  %s1 = inlined_call_operand.vmem [shape: f32[4,1,32], index: 1, kind: input, shape index: {}]
  %s2 = inlined_call_operand.vmem [shape: f32[32,32], index: 2, kind: input, shape index: {}]
  %s3 = inlined_call_operand.vmem [shape: f32[32,32], index: 3, kind: input, shape index: {}]
  %s4 = inlined_call_operand.vmem [shape: f32[32,32], index: 4, kind: input, shape index: {}]
  %s5 = inlined_call_operand.hbm [shape: f32[32,32], index: 5, kind: input, shape index: {}]
  %s6 = inlined_call_operand.vmem [shape: f32[1,32], index: 6, kind: input, shape index: {}]
  %s7 = inlined_call_operand.vmem [shape: f32[1,32], index: 7, kind: input, shape index: {}]
  %s8 = inlined_call_operand.vmem [shape: f32[1,32], index: 8, kind: input, shape index: {}]
  %s9 = inlined_call_operand.hbm [shape: f32[4,8,32], index: 9, kind: output, shape index: {}]
  %s10 = sld [smem:[#allocation0]]
  $region73: #{tpu_custom_call.1} parent=0
    _
  %s12 = ssub.s32 1, %s10
  %s13 = scalar_select 0, %s12, %s10
  $region1: #{tpu_custom_call.1} parent=0
    #allocation2 [shape = 'u8[16384]{0}', space=vmem, size = 0x4000, scoped, tag = 'input window, operand 5, single buffered']
    #allocation3 [shape = 's32[2]{0}', space=sflag, size = 0x8, scoped, tag = 'scoped memory for tpu_custom_call.1']
    #allocation4 [shape = 's32[2]{0}', space=sflag, size = 0x8, scoped, tag = 'scoped memory for tpu_custom_call.1']
    #allocation5 [shape = 'u8[16384]{0}', space=vmem, size = 0x4000, scoped, tag = 'output window, operand 0']
    %14 = vsyncpa [#allocation3], 0
    %15 = vsyncpa [#allocation4], 0
    %s16 = scalar_lea.sflag [#allocation4], 1
    %17 = vsyncpa %s16, 0
    loop: start=0, step=1, limit=4
    $region2: #{tpu_custom_call.1} parent=1 // loop_pre_header
      _
    $region3: #{tpu_custom_call.1} parent=1 // loop_header
      %s19 = sphi 0, %s23
      %p20 = scmp.ge.s32.totalorder %s19, 4
      %s29 = sphi 0, %s31
      %s32 = sphi 0, %s29
      %s33 = sphi 0, %s32
      %s49 = sphi 0, %s33
      %s55 = sphi 0, %s57
      %s58 = sphi 0, %s55
      %s59 = sphi 0, %s58
      %s75 = sphi 0, %s59
      %s79 = sphi 0, %s79
      %s81 = sphi 0, %s79
      %s82 = sphi 0, %s81
      %s96 = sphi 0, %s82
      %s100 = sphi 0, %s100
      %s102 = sphi 0, %s100
      %s103 = sphi 0, %s102
      %s117 = sphi 0, %s103
      %s121 = sphi 0, %s121
      %s123 = sphi 0, %s121
      %s124 = sphi 0, %s123
      %s138 = sphi 0, %s124
      %s142 = sphi 0, %s142
      %s144 = sphi 0, %s142
      %s145 = sphi 0, %s144
      %s159 = sphi 0, %s145
      %s163 = sphi 0, %s163
      %s165 = sphi 0, %s163
      %s166 = sphi 0, %s165
      %s180 = sphi 0, %s166
      %s184 = sphi 0, %s184
      %s186 = sphi 0, %s184
      %s187 = sphi 0, %s186
      %s201 = sphi 0, %s187
      %s205 = sphi 0, %s205
      %s207 = sphi 0, %s205
      %s208 = sphi 0, %s207
      %s222 = sphi 0, %s208
      %s228 = sphi 0, %s230
      %s231 = sphi 0, %s228
      %s232 = sphi 0, %s231
      %s248 = sphi 0, %s232
    $region4: #{tpu_custom_call.1} parent=1 // loop_header_branch
      %22 = sbr.rel (%p20) target = $region8
    $region5: #{tpu_custom_call.1} parent=1 // loop_body
      %s24 = ssub.s32 %s19, 1
      %s25 = ssub.s32 %s19, 2
      %s26 = sadd.s32 %s19, 1
      %s27 = ssub.s32 %s19, %s26
      %p28 = scmp.eq.s32.totalorder %s27, 0
      %s30 = sadd.s32 %s29, 1
      %s31 = scalar_select %p28, %s29, %s30
      %p34 = pneg %p28
      %p35 = scmp.eq.s32.totalorder %s19, 1
      %p36 = por %p34, %p35
      %p37 = scmp.ne.s32.totalorder %s29, %s32
      %p38 = scmp.eq.s32.totalorder %s19, 0
      %p39 = por %p37, %p38
      %p40 = scmp.ne.s32.totalorder %s29, %s32
      %p41 = scmp.eq.s32.totalorder %s24, 1
      %p42 = por %p40, %p41
      %p43 = scmp.ne.s32.totalorder %s32, %s33
      %p44 = scmp.eq.s32.totalorder %s24, 0
      %p45 = por %p43, %p44
      %p46 = scmp.ne.s32.totalorder %s32, %s33
      %p47 = scmp.eq.s32.totalorder %s25, 1
      %p48 = por %p46, %p47
      %p50 = scmp.ne.s32.totalorder %s33, %s49
      %p51 = scmp.eq.s32.totalorder %s25, 0
      %p52 = por %p50, %p51
      %s53 = ssub.s32 %s19, %s26
      %p54 = scmp.eq.s32.totalorder %s53, 0
      %s56 = sadd.s32 %s55, 1
      %s57 = scalar_select %p54, %s55, %s56
      %p60 = pneg %p54
      %p61 = scmp.eq.s32.totalorder %s19, 1
      %p62 = por %p60, %p61
      %p63 = scmp.ne.s32.totalorder %s55, %s58
      %p64 = scmp.eq.s32.totalorder %s19, 0
      %p65 = por %p63, %p64
      %p66 = scmp.ne.s32.totalorder %s55, %s58
      %p67 = scmp.eq.s32.totalorder %s24, 1
      %p68 = por %p66, %p67
      %p69 = scmp.ne.s32.totalorder %s58, %s59
      %p70 = scmp.eq.s32.totalorder %s24, 0
      %p71 = por %p69, %p70
      %p72 = scmp.ne.s32.totalorder %s58, %s59
      %p73 = scmp.eq.s32.totalorder %s25, 1
      %p74 = por %p72, %p73
      %p76 = scmp.ne.s32.totalorder %s59, %s75
      %p77 = scmp.eq.s32.totalorder %s25, 0
      %p78 = por %p76, %p77
      %s80 = sadd.s32 %s79, 1
      %p83 = scmp.eq.s32.totalorder %s19, 1
      %p84 = scmp.ne.s32.totalorder %s79, %s81
      %p85 = scmp.eq.s32.totalorder %s19, 0
      %p86 = por %p84, %p85
      %p87 = scmp.ne.s32.totalorder %s79, %s81
      %p88 = scmp.eq.s32.totalorder %s24, 1
      %p89 = por %p87, %p88
      %p90 = scmp.ne.s32.totalorder %s81, %s82
      %p91 = scmp.eq.s32.totalorder %s24, 0
      %p92 = por %p90, %p91
      %p93 = scmp.ne.s32.totalorder %s81, %s82
      %p94 = scmp.eq.s32.totalorder %s25, 1
      %p95 = por %p93, %p94
      %p97 = scmp.ne.s32.totalorder %s82, %s96
      %p98 = scmp.eq.s32.totalorder %s25, 0
      %p99 = por %p97, %p98
      %s101 = sadd.s32 %s100, 1
      %p104 = scmp.eq.s32.totalorder %s19, 1
      %p105 = scmp.ne.s32.totalorder %s100, %s102
      %p106 = scmp.eq.s32.totalorder %s19, 0
      %p107 = por %p105, %p106
      %p108 = scmp.ne.s32.totalorder %s100, %s102
      %p109 = scmp.eq.s32.totalorder %s24, 1
      %p110 = por %p108, %p109
      %p111 = scmp.ne.s32.totalorder %s102, %s103
      %p112 = scmp.eq.s32.totalorder %s24, 0
      %p113 = por %p111, %p112
      %p114 = scmp.ne.s32.totalorder %s102, %s103
      %p115 = scmp.eq.s32.totalorder %s25, 1
      %p116 = por %p114, %p115
      %p118 = scmp.ne.s32.totalorder %s103, %s117
      %p119 = scmp.eq.s32.totalorder %s25, 0
      %p120 = por %p118, %p119
      %s122 = sadd.s32 %s121, 1
      %p125 = scmp.eq.s32.totalorder %s19, 1
      %p126 = scmp.ne.s32.totalorder %s121, %s123
      %p127 = scmp.eq.s32.totalorder %s19, 0
      %p128 = por %p126, %p127
      %p129 = scmp.ne.s32.totalorder %s121, %s123
      %p130 = scmp.eq.s32.totalorder %s24, 1
      %p131 = por %p129, %p130
      %p132 = scmp.ne.s32.totalorder %s123, %s124
      %p133 = scmp.eq.s32.totalorder %s24, 0
      %p134 = por %p132, %p133
      %p135 = scmp.ne.s32.totalorder %s123, %s124
      %p136 = scmp.eq.s32.totalorder %s25, 1
      %p137 = por %p135, %p136
      %p139 = scmp.ne.s32.totalorder %s124, %s138
      %p140 = scmp.eq.s32.totalorder %s25, 0
      %p141 = por %p139, %p140
      %s143 = sadd.s32 %s142, 1
      %p146 = scmp.eq.s32.totalorder %s19, 1
      %p147 = scmp.ne.s32.totalorder %s142, %s144
      %p148 = scmp.eq.s32.totalorder %s19, 0
      %p149 = por %p147, %p148
      %p150 = scmp.ne.s32.totalorder %s142, %s144
      %p151 = scmp.eq.s32.totalorder %s24, 1
      %p152 = por %p150, %p151
      %p153 = scmp.ne.s32.totalorder %s144, %s145
      %p154 = scmp.eq.s32.totalorder %s24, 0
      %p155 = por %p153, %p154
      %p156 = scmp.ne.s32.totalorder %s144, %s145
      %p157 = scmp.eq.s32.totalorder %s25, 1
      %p158 = por %p156, %p157
      %p160 = scmp.ne.s32.totalorder %s145, %s159
      %p161 = scmp.eq.s32.totalorder %s25, 0
      %p162 = por %p160, %p161
      %s164 = sadd.s32 %s163, 1
      %p167 = scmp.eq.s32.totalorder %s19, 1
      %p168 = scmp.ne.s32.totalorder %s163, %s165
      %p169 = scmp.eq.s32.totalorder %s19, 0
      %p170 = por %p168, %p169
      %p171 = scmp.ne.s32.totalorder %s163, %s165
      %p172 = scmp.eq.s32.totalorder %s24, 1
      %p173 = por %p171, %p172
      %p174 = scmp.ne.s32.totalorder %s165, %s166
      %p175 = scmp.eq.s32.totalorder %s24, 0
      %p176 = por %p174, %p175
      %p177 = scmp.ne.s32.totalorder %s165, %s166
      %p178 = scmp.eq.s32.totalorder %s25, 1
      %p179 = por %p177, %p178
      %p181 = scmp.ne.s32.totalorder %s166, %s180
      %p182 = scmp.eq.s32.totalorder %s25, 0
      %p183 = por %p181, %p182
      %s185 = sadd.s32 %s184, 1
      %p188 = scmp.eq.s32.totalorder %s19, 1
      %p189 = scmp.ne.s32.totalorder %s184, %s186
      %p190 = scmp.eq.s32.totalorder %s19, 0
      %p191 = por %p189, %p190
      %p192 = scmp.ne.s32.totalorder %s184, %s186
      %p193 = scmp.eq.s32.totalorder %s24, 1
      %p194 = por %p192, %p193
      %p195 = scmp.ne.s32.totalorder %s186, %s187
      %p196 = scmp.eq.s32.totalorder %s24, 0
      %p197 = por %p195, %p196
      %p198 = scmp.ne.s32.totalorder %s186, %s187
      %p199 = scmp.eq.s32.totalorder %s25, 1
      %p200 = por %p198, %p199
      %p202 = scmp.ne.s32.totalorder %s187, %s201
      %p203 = scmp.eq.s32.totalorder %s25, 0
      %p204 = por %p202, %p203
      %s206 = sadd.s32 %s205, 1
      %p209 = scmp.eq.s32.totalorder %s19, 1
      %p210 = scmp.ne.s32.totalorder %s205, %s207
      %p211 = scmp.eq.s32.totalorder %s19, 0
      %p212 = por %p210, %p211
      %p213 = scmp.ne.s32.totalorder %s205, %s207
      %p214 = scmp.eq.s32.totalorder %s24, 1
      %p215 = por %p213, %p214
      %p216 = scmp.ne.s32.totalorder %s207, %s208
      %p217 = scmp.eq.s32.totalorder %s24, 0
      %p218 = por %p216, %p217
      %p219 = scmp.ne.s32.totalorder %s207, %s208
      %p220 = scmp.eq.s32.totalorder %s25, 1
      %p221 = por %p219, %p220
      %p223 = scmp.ne.s32.totalorder %s208, %s222
      %p224 = scmp.eq.s32.totalorder %s25, 0
      %p225 = por %p223, %p224
      %s226 = ssub.s32 %s19, %s26
      %p227 = scmp.eq.s32.totalorder %s226, 0
      %s229 = sadd.s32 %s228, 1
      %s230 = scalar_select %p227, %s228, %s229
      %p233 = pneg %p227
      %p234 = scmp.eq.s32.totalorder %s19, 1
      %p235 = por %p233, %p234
      %p236 = scmp.ne.s32.totalorder %s228, %s231
      %p237 = scmp.eq.s32.totalorder %s19, 0
      %p238 = por %p236, %p237
      %p239 = scmp.ne.s32.totalorder %s228, %s231
      %p240 = scmp.eq.s32.totalorder %s24, 1
      %p241 = por %p239, %p240
      %p242 = scmp.ne.s32.totalorder %s231, %s232
      %p243 = scmp.eq.s32.totalorder %s24, 0
      %p244 = por %p242, %p243
      %p245 = scmp.ne.s32.totalorder %s231, %s232
      %p246 = scmp.eq.s32.totalorder %s25, 1
      %p247 = por %p245, %p246
      %p249 = scmp.ne.s32.totalorder %s232, %s248
      %p250 = scmp.eq.s32.totalorder %s25, 0
      %p251 = por %p249, %p250
      %p252 = scmp.le.s32.totalorder 1, %s19
      %p253 = scmp.lt.s32.totalorder %s19, 3
      %p254 = pnand %p252, %p253
      %p255 = pneg %p254
      // Predicated region
      $region9: #{tpu_custom_call.1} parent=5 // pred_check
        _
      $region10: #{tpu_custom_call.1} parent=5 // pred_check_branch
        %257 = sbr.rel (%p254) target = $region12
      $region11: #{tpu_custom_call.1} parent=5 // pred_region
        %s258 = ssub.s32 %s19, 1
        // Predicated region
        $region13: #{tpu_custom_call.1} parent=11 // pred_check
          %p259 = pneg %p92
        $region14: #{tpu_custom_call.1} parent=11 // pred_check_branch
          %261 = sbr.rel (%p259) target = $region16
        $region15: #{tpu_custom_call.1} parent=11 // pred_region
          _
        $region16: #{tpu_custom_call.1} parent=11 // pred_fallthru
          _
        // Predicated region
        $region17: #{tpu_custom_call.1} parent=11 // pred_check
          %p262 = pneg %p113
        $region18: #{tpu_custom_call.1} parent=11 // pred_check_branch
          %264 = sbr.rel (%p262) target = $region20
        $region19: #{tpu_custom_call.1} parent=11 // pred_region
          _
        $region20: #{tpu_custom_call.1} parent=11 // pred_fallthru
          _
        // Predicated region
        $region21: #{tpu_custom_call.1} parent=11 // pred_check
          %p265 = pneg %p134
        $region22: #{tpu_custom_call.1} parent=11 // pred_check_branch
          %267 = sbr.rel (%p265) target = $region24
        $region23: #{tpu_custom_call.1} parent=11 // pred_region
          _
        $region24: #{tpu_custom_call.1} parent=11 // pred_fallthru
          _
        // Predicated region
        $region25: #{tpu_custom_call.1} parent=11 // pred_check
          %p268 = pneg %p155
        $region26: #{tpu_custom_call.1} parent=11 // pred_check_branch
          %270 = sbr.rel (%p268) target = $region28
        $region27: #{tpu_custom_call.1} parent=11 // pred_region
          %s272 = ssub.s32 512, 512
          %273 = vsyncadd [#allocation3], %s272
          %s274 = sshll.u32 [#allocation2], 4
          %s275 = int_to_ptr.vmem [resolvable:$true] %s274
          %280 = dma.hbm_to_vmem [thread:$0]  %s5, 512, %s275, [#allocation3], 128, 128, 8
        $region28: #{tpu_custom_call.1} parent=11 // pred_fallthru
          _
        // Predicated region
        $region29: #{tpu_custom_call.1} parent=11 // pred_check
          %p281 = pneg %p176
        $region30: #{tpu_custom_call.1} parent=11 // pred_check_branch
          %283 = sbr.rel (%p281) target = $region32
        $region31: #{tpu_custom_call.1} parent=11 // pred_region
          _
        $region32: #{tpu_custom_call.1} parent=11 // pred_fallthru
          _
        // Predicated region
        $region33: #{tpu_custom_call.1} parent=11 // pred_check
          %p284 = pneg %p197
        $region34: #{tpu_custom_call.1} parent=11 // pred_check_branch
          %286 = sbr.rel (%p284) target = $region36
        $region35: #{tpu_custom_call.1} parent=11 // pred_region
          _
        $region36: #{tpu_custom_call.1} parent=11 // pred_fallthru
          _
        // Predicated region
        $region37: #{tpu_custom_call.1} parent=11 // pred_check
          %p287 = pneg %p218
        $region38: #{tpu_custom_call.1} parent=11 // pred_check_branch
          %289 = sbr.rel (%p287) target = $region40
        $region39: #{tpu_custom_call.1} parent=11 // pred_region
          _
        $region40: #{tpu_custom_call.1} parent=11 // pred_fallthru
          _
      $region12: #{tpu_custom_call.1} parent=5 // pred_fallthru
        _
      %p290 = scmp.lt.s32.totalorder %s19, 2
      // Predicated region
      $region41: #{tpu_custom_call.1} parent=5 // pred_check
        %p291 = pneg %p290
      $region42: #{tpu_custom_call.1} parent=5 // pred_check_branch
        %293 = sbr.rel (%p291) target = $region44
      $region43: #{tpu_custom_call.1} parent=5 // pred_region
        // Predicated region
        $region45: #{tpu_custom_call.1} parent=43 // pred_check
          %p294 = pneg %p39
        $region46: #{tpu_custom_call.1} parent=43 // pred_check_branch
          %296 = sbr.rel (%p294) target = $region48
        $region47: #{tpu_custom_call.1} parent=43 // pred_region
          %s297 = smul.u32 2, %s19
          %p298 = scmp.lt.s32.totalorder %s297, 3
          %s299 = scalar_select %p298, %s297, 3
          %s300 = smul.addr %s299, 2
          %s301 = smul.addr %s300, 8
          %s302 = scalar_lea.vmem %s0, %s301
          %s303 = smul.u32 2, %s19
        $region48: #{tpu_custom_call.1} parent=43 // pred_fallthru
          _
        // Predicated region
        $region49: #{tpu_custom_call.1} parent=43 // pred_check
          %p304 = pneg %p65
        $region50: #{tpu_custom_call.1} parent=43 // pred_check_branch
          %306 = sbr.rel (%p304) target = $region52
        $region51: #{tpu_custom_call.1} parent=43 // pred_region
          %s307 = smul.u32 2, %s19
          %p308 = scmp.lt.s32.totalorder %s307, 3
          %s309 = scalar_select %p308, %s307, 3
          %s310 = scalar_lea.vmem %s1, %s309
          %s311 = smul.u32 2, %s19
        $region52: #{tpu_custom_call.1} parent=43 // pred_fallthru
          _
      $region44: #{tpu_custom_call.1} parent=5 // pred_fallthru
        _
      %p312 = scmp.le.s32.totalorder 1, %s19
      %p313 = scmp.lt.s32.totalorder %s19, 3
      %p314 = pnand %p312, %p313
      %p315 = pneg %p314
      // Predicated region
      $region53: #{tpu_custom_call.1} parent=5 // pred_check
        _
      $region54: #{tpu_custom_call.1} parent=5 // pred_check_branch
        %317 = sbr.rel (%p314) target = $region56
      $region55: #{tpu_custom_call.1} parent=5 // pred_region
        %s318 = ssub.s32 %s19, 1
        // Predicated region
        $region57: #{tpu_custom_call.1} parent=55 // pred_check
          %p319 = pneg %p155
        $region58: #{tpu_custom_call.1} parent=55 // pred_check_branch
          %321 = sbr.rel (%p319) target = $region60
        $region59: #{tpu_custom_call.1} parent=55 // pred_region
          %322 = dma.done [#allocation3], 512
        $region60: #{tpu_custom_call.1} parent=55 // pred_fallthru
          _
        %s323 = smul.u32 2, %s24
        %p324 = scmp.lt.s32.totalorder %s323, 3
        %s325 = scalar_select %p324, %s323, 3
        %s326 = smul.addr %s325, 2
        %s327 = smul.addr %s326, 8
        %s328 = scalar_lea.vmem %s0, %s327
        %p329 = pneg %p45
        %p330 = pneg %p42
        %s331 = smul.u32 2, %s24
        %p332 = scmp.lt.s32.totalorder %s331, 3
        %s333 = scalar_select %p332, %s331, 3
        %s334 = scalar_lea.vmem %s1, %s333
        %p335 = pneg %p71
        %p336 = pneg %p68
        %p337 = pneg %p92
        %p338 = pneg %p89
        %p339 = pneg %p113
        %p340 = pneg %p110
        %p341 = pneg %p134
        %p342 = pneg %p131
        %p343 = pneg %p155
        %p344 = pneg %p152
        %p345 = pneg %p176
        %p346 = pneg %p173
        %p347 = pneg %p197
        %p348 = pneg %p194
        %p349 = pneg %p218
        %p350 = pneg %p215
        %p351 = pneg %p244
        %p352 = pneg %p241
        %s353 = sand.u32 %s231, 1
        %s354 = scalar_lea.sflag [#allocation4], %s353
        %s355 = sand.u32 %s231, 1
        %s356 = smul.addr %s355, 16
        %s357 = scalar_lea.vmem [#allocation5], %s356
        %s358 = smul.u32 2, %s24
        %p359 = scmp.lt.s32.totalorder %s358, 3
        %s360 = scalar_select %p359, %s358, 3
        %s361 = smul.addr %s360, 2
        %s362 = smul.addr %s361, 8
        %s363 = scalar_lea.vmem %s0, %s362
        %s364 = smul.u32 2, %s24
        %s365 = smul.u32 2, %s24
        %p366 = scmp.lt.s32.totalorder %s365, 3
        %s367 = scalar_select %p366, %s365, 3
        %s368 = scalar_lea.vmem %s1, %s367
        %s369 = smul.u32 2, %s24
        %s370 = smul.u32 2, %s24
        %v371 = vld [vmem:[%s7] sm:$0x1]
        %v372 = vld [vmem:[%s8] sm:$0x1]
        %v373 = vld [vmem:[%s363] sm:$0xff]
        %v374 = vld [vmem:[%s363 + $0x8] sm:$0x3]
        %v375 = vld [vmem:[%s363 + $0x10] sm:$0xff]
        %v376 = vld [vmem:[%s363 + $0x18] sm:$0x3]
        %vm377 = vcmask 261121
        %v378 = vsel %vm377, %v373, 0.0
        %379 = vadd.xlane.f32.xlu0 %v378
        %v380 = vpop.xlane.xlu0 %379
        %vm381 = vcmask 253952
        %v382 = vsel %vm381, %v374, 0.0
        %383 = vadd.xlane.f32.xlu0 %v382
        %v384 = vpop.xlane.xlu0 %383
        %v385 = vsel %vm377, %v375, 0.0
        %386 = vadd.xlane.f32.xlu0 %v385
        %v387 = vpop.xlane.xlu0 %386
        %v388 = vsel %vm381, %v376, 0.0
        %389 = vadd.xlane.f32.xlu0 %v388
        %v390 = vpop.xlane.xlu0 %389
        %v391 = vrcp.pop 32.0
        %v392 = vmul.f32 %v380, %v391
        %v393 = vmul.f32 %v384, %v391
        %v394 = vmul.f32 %v387, %v391
        %v395 = vmul.f32 %v390, %v391
        %v396 = vsub.f32 %v373, %v392
        %v397 = vsub.f32 %v374, %v393
        %v398 = vsub.f32 %v375, %v394
        %v399 = vsub.f32 %v376, %v395
        %v400 = vmul.f32 %v396, %v396
        %v401 = vmul.f32 %v397, %v397
        %v402 = vmul.f32 %v398, %v398
        %v403 = vmul.f32 %v399, %v399
        %v404 = vsel %vm377, %v400, 0.0
        %405 = vadd.xlane.f32.xlu0 %v404
        %v406 = vpop.xlane.xlu0 %405
        %v407 = vsel %vm381, %v401, 0.0
        %408 = vadd.xlane.f32.xlu0 %v407
        %v409 = vpop.xlane.xlu0 %408
        %v410 = vsel %vm377, %v402, 0.0
        %411 = vadd.xlane.f32.xlu0 %v410
        %v412 = vpop.xlane.xlu0 %411
        %v413 = vsel %vm381, %v403, 0.0
        %414 = vadd.xlane.f32.xlu0 %v413
        %v415 = vpop.xlane.xlu0 %414
        %v416 = vmul.f32 %v406, %v391
        %v417 = vmul.f32 %v409, %v391
        %v418 = vmul.f32 %v412, %v391
        %v419 = vmul.f32 %v415, %v391
        %v420 = vadd.f32 %v416, 1e-05
        %v421 = vadd.f32 %v417, 1e-05
        %v422 = vadd.f32 %v418, 1e-05
        %v423 = vadd.f32 %v419, 1e-05
        %v424 = vrsqrt.pop %v420
        %v425 = vrsqrt.pop %v421
        %v426 = vrsqrt.pop %v422
        %v427 = vrsqrt.pop %v423
        %v428 = vmul.f32 %v396, %v424
        %v429 = vmul.f32 %v397, %v425
        %v430 = vmul.f32 %v398, %v426
        %v431 = vmul.f32 %v399, %v427
        %v433 = vlaneseq
        %v434 = vshrl.u32 %v433, 7
        %v435 = vsub.s32 0, %v434
        %v436 = vrot.slane %v371, %v435
        %v438 = vmul.f32 %v428, %v436
        %v439 = vmul.f32 %v429, %v436
        %v440 = vmul.f32 %v430, %v436
        %v441 = vmul.f32 %v431, %v436
        %v443 = vlaneseq
        %v444 = vshrl.u32 %v443, 7
        %v445 = vsub.s32 0, %v444
        %v446 = vrot.slane %v372, %v445
        %v448 = vadd.f32 %v438, %v446
        %v449 = vadd.f32 %v439, %v446
        %v450 = vadd.f32 %v440, %v446
        %v451 = vadd.f32 %v441, %v446
        %vm456 = vcmask 1046528
        %v457 = vrot.slane %v448, 1
        %v458 = vrot.slane %v449, 1
        %v459 = vsel %vm456, %v457, %v458
        %v460 = vrot.slane %v450, 1
        %v461 = vrot.slane %v451, 1
        %v462 = vsel %vm456, %v460, %v461
        %v463 = vld [vmem:[%s2] sm:$0xff]
        %v464 = vld [vmem:[%s2 + $0x8] sm:$0xff]
        %v465 = vld [vmem:[%s2 + $0x10] sm:$0xff]
        %v466 = vld [vmem:[%s2 + $0x18] sm:$0xff]
        %vm467 = vcmask 261120
        %v468 = vsel %vm467, %v459, 0
        %v470 = vsel %vm467, %v462, 0
        %472 = vmatprep.subr.mxu0 0.0
        %473 = vmatpush1.msra.mxu0 %v463
        %474 = vmatprep.subr.mxu0 0.0
        %475 = vmatpush1.msra.mxu0 %v464
        %476 = vmatprep.subr.mxu0 0.0
        %477 = vmatpush1.msra.mxu0 %v465
        %478 = vmatprep.subr.mxu0 0.0
        %479 = vmatpush1.msra.mxu0 %v466
        %480 = vmatprep.subr.mxu0 0.0
        %481 = vmatpush1.msra.mxu0 0.0
        %482 = vmatprep.subr.mxu0 0.0
        %483 = vmatpush1.msra.mxu0 0.0
        %484 = vmatprep.subr.mxu0 0.0
        %485 = vmatpush1.msra.mxu0 0.0
        %486 = vmatprep.subr.mxu0 0.0
        %487 = vmatpush1.msra.mxu0 0.0
        %488 = vmatprep.subr.mxu0 0.0
        %489 = vmatpush1.msra.mxu0 0.0
        %490 = vmatprep.subr.mxu0 0.0
        %491 = vmatpush1.msra.mxu0 0.0
        %492 = vmatprep.subr.mxu0 0.0
        %493 = vmatpush1.msra.mxu0 0.0
        %494 = vmatprep.subr.mxu0 0.0
        %495 = vmatpush1.msra.mxu0 0.0
        %496 = vmatprep.subr.mxu0 0.0
        %497 = vmatpush1.msra.mxu0 0.0
        %498 = vmatprep.subr.mxu0 0.0
        %499 = vmatpush1.msra.mxu0 0.0
        %500 = vmatprep.subr.mxu0 0.0
        %501 = vmatpush1.msra.mxu0 0.0
        %502 = vmatprep.subr.mxu0 0.0
        %503 = vmatpush1.msra.mxu0 0.0
        %504 = vmatprep.subr.mxu0 0.0
        %505 = vmatpush1.msra.mxu0 0.0
        %506 = vmatprep.subr.mxu0 0.0
        %507 = vmatpush1.msra.mxu0 0.0
        %508 = vmatprep.subr.mxu0 0.0
        %509 = vmatpush1.msra.mxu0 0.0
        %510 = vmatprep.subr.mxu0 0.0
        %511 = vmatpush1.msra.mxu0 0.0
        %512 = vmatprep.subr.mxu0 0.0
        %513 = vmatpush1.msra.mxu0 0.0
        %514 = vmatprep.subr.mxu0 0.0
        %515 = vmatpush1.msra.mxu0 0.0
        %516 = vmatprep.subr.mxu0 0.0
        %517 = vmatpush1.msra.mxu0 0.0
        %518 = vmatprep.subr.mxu0 0.0
        %519 = vmatpush1.msra.mxu0 0.0
        %520 = vmatprep.subr.mxu0 0.0
        %521 = vmatpush1.msra.mxu0 0.0
        %522 = vmatprep.subr.mxu0 0.0
        %523 = vmatpush1.msra.mxu0 0.0
        %524 = vmatprep.subr.mxu0 0.0
        %525 = vmatpush1.msra.mxu0 0.0
        %526 = vmatprep.subr.mxu0 0.0
        %527 = vmatpush1.msra.mxu0 0.0
        %528 = vmatprep.subr.mxu0 0.0
        %529 = vmatpush1.msra.mxu0 0.0
        %530 = vmatprep.subr.mxu0 0.0
        %531 = vmatpush1.msra.mxu0 0.0
        %532 = vmatprep.subr.mxu0 0.0
        %533 = vmatpush1.msra.mxu0 0.0
        %534 = vmatprep.subr.mxu0 0.0
        %535 = vmatpush1.msra.mxu0 0.0
        %536 = vmatprep.mubr.f32.mxu0 0.0
        %537 = vmatmul.mubr.f32.gmra.mrb[0].mxu0 %v468
        %v538 = vpop.f32.mrb[0].mxu0
        %v539 = vadd.f32 0.0, %v538
        %v540 = vpop.f32.mrb[0].mxu0
        %541 = vmatprep.mubr.f32.mxu0 0.0
        %542 = vmatmul.mubr.f32.gmra.mrb[0].mxu0 %v470
        %v543 = vpop.f32.mrb[0].mxu0
        %v544 = vadd.f32 0.0, %v543
        %v545 = vpop.f32.mrb[0].mxu0
        %546 = vdwg.mxu0
        %v547 = vld [vmem:[%s368] sm:$0x1]
        %v548 = vld [vmem:[%s368 + $0x1] sm:$0x1]
        %v551 = vcombine.low %v547, %v548
        %v553 = vunpack.c.l.s4 1966171168
        %v554 = vunpack.c.0.s8 %v553
        %v555 = vlaneseq
        %v556 = vshrl.u32 %v555, 7
        %v557 = vsub.s32 %v554, %v556
        %v558 = vrot.slane %v551, %v557
        %v560 = vunpack.c.l.s4 1966171168
        %v561 = vunpack.c.0.s8 %v560
        %v562 = vlaneseq
        %v563 = vshrl.u32 %v562, 7
        %v564 = vsub.s32 %v561, %v563
        %v565 = vrot.slane %v558, %v564
        %vm567 = vcmask 254976
        %v568 = vsel %vm567, %v565, 0.0
        %569 = vadd.xlane.f32.xlu0 %v568
        %v570 = vpop.xlane.xlu0 %569
        %v571 = vmul.f32 %v570, %v391
        %v573 = vlaneseq
        %v574 = vshrl.u32 %v573, 7
        %v575 = vsub.s32 0, %v574
        %v576 = vrot.slane %v571, %v575
        %v577 = vlaneseq
        %v578 = vshrl.u32 %v577, 7
        %v579 = vsub.s32 1, %v578
        %v580 = vrot.slane %v571, %v579
        %v583 = vsub.f32 %v547, %v576
        %v584 = vsub.f32 %v548, %v580
        %v585 = vmul.f32 %v583, %v583
        %v586 = vmul.f32 %v584, %v584
        %v589 = vcombine.low %v585, %v586
        %v591 = vunpack.c.l.s4 1966171168
        %v592 = vunpack.c.0.s8 %v591
        %v593 = vlaneseq
        %v594 = vshrl.u32 %v593, 7
        %v595 = vsub.s32 %v592, %v594
        %v596 = vrot.slane %v589, %v595
        %v598 = vunpack.c.l.s4 1966171168
        %v599 = vunpack.c.0.s8 %v598
        %v600 = vlaneseq
        %v601 = vshrl.u32 %v600, 7
        %v602 = vsub.s32 %v599, %v601
        %v603 = vrot.slane %v596, %v602
        %v605 = vsel %vm567, %v603, 0.0
        %606 = vadd.xlane.f32.xlu0 %v605
        %v607 = vpop.xlane.xlu0 %606
        %v608 = vmul.f32 %v607, %v391
        %v609 = vadd.f32 %v608, 1e-05
        %v610 = vrsqrt.pop %v609
        %v612 = vlaneseq
        %v613 = vshrl.u32 %v612, 7
        %v614 = vsub.s32 0, %v613
        %v615 = vrot.slane %v610, %v614
        %v616 = vlaneseq
        %v617 = vshrl.u32 %v616, 7
        %v618 = vsub.s32 1, %v617
        %v619 = vrot.slane %v610, %v618
        %v622 = vmul.f32 %v583, %v615
        %v623 = vmul.f32 %v584, %v619
        %v625 = vunpack.c.l.s4 1966171168
        %v626 = vunpack.c.0.s8 %v625
        %v627 = vlaneseq
        %v628 = vshrl.u32 %v627, 7
        %v629 = vsub.s32 %v626, %v628
        %v630 = vrot.slane %v436, %v629
        %v631 = vcombine.high %v630, %v630
        %v633 = vunpack.c.l.s4 1966171168
        %v634 = vunpack.c.0.s8 %v633
        %v635 = vlaneseq
        %v636 = vshrl.u32 %v635, 7
        %v637 = vsub.s32 %v634, %v636
        %v638 = vrot.slane %v630, %v637
        %v640 = vunpack.c.l.s4 1966171168
        %v641 = vunpack.c.0.s8 %v640
        %v642 = vlaneseq
        %v643 = vshrl.u32 %v642, 7
        %v644 = vsub.s32 %v641, %v643
        %v645 = vrot.slane %v631, %v644
        %v648 = vmul.f32 %v622, %v638
        %v649 = vmul.f32 %v623, %v645
        %v651 = vunpack.c.l.s4 1966171168
        %v652 = vunpack.c.0.s8 %v651
        %v653 = vlaneseq
        %v654 = vshrl.u32 %v653, 7
        %v655 = vsub.s32 %v652, %v654
        %v656 = vrot.slane %v446, %v655
        %v657 = vcombine.high %v656, %v656
        %v659 = vunpack.c.l.s4 1966171168
        %v660 = vunpack.c.0.s8 %v659
        %v661 = vlaneseq
        %v662 = vshrl.u32 %v661, 7
        %v663 = vsub.s32 %v660, %v662
        %v664 = vrot.slane %v656, %v663
        %v666 = vunpack.c.l.s4 1966171168
        %v667 = vunpack.c.0.s8 %v666
        %v668 = vlaneseq
        %v669 = vshrl.u32 %v668, 7
        %v670 = vsub.s32 %v667, %v669
        %v671 = vrot.slane %v657, %v670
        %v674 = vadd.f32 %v648, %v664
        %v675 = vadd.f32 %v649, %v671
        %v676 = vld [vmem:[%s3] sm:$0xff]
        %v677 = vld [vmem:[%s3 + $0x8] sm:$0xff]
        %v678 = vld [vmem:[%s3 + $0x10] sm:$0xff]
        %v679 = vld [vmem:[%s3 + $0x18] sm:$0xff]
        %v682 = vcombine.low %v674, %v675
        %v684 = vunpack.c.l.s4 1966171168
        %v685 = vunpack.c.0.s8 %v684
        %v686 = vlaneseq
        %v687 = vshrl.u32 %v686, 7
        %v688 = vsub.s32 %v685, %v687
        %v689 = vrot.slane %v682, %v688
        %v691 = vunpack.c.l.s4 1966171168
        %v692 = vunpack.c.0.s8 %v691
        %v693 = vlaneseq
        %v694 = vshrl.u32 %v693, 7
        %v695 = vsub.s32 %v692, %v694
        %v696 = vrot.slane %v689, %v695
        %v697 = vsel %vm467, %v696, 0
        %699 = vmatprep.subr.mxu0 0.0
        %700 = vmatpush1.msra.mxu0 %v676
        %701 = vmatprep.subr.mxu0 0.0
        %702 = vmatpush1.msra.mxu0 %v677
        %703 = vmatprep.subr.mxu0 0.0
        %704 = vmatpush1.msra.mxu0 %v678
        %705 = vmatprep.subr.mxu0 0.0
        %706 = vmatpush1.msra.mxu0 %v679
        %707 = vmatprep.subr.mxu0 0.0
        %708 = vmatpush1.msra.mxu0 0.0
        %709 = vmatprep.subr.mxu0 0.0
        %710 = vmatpush1.msra.mxu0 0.0
        %711 = vmatprep.subr.mxu0 0.0
        %712 = vmatpush1.msra.mxu0 0.0
        %713 = vmatprep.subr.mxu0 0.0
        %714 = vmatpush1.msra.mxu0 0.0
        %715 = vmatprep.subr.mxu0 0.0
        %716 = vmatpush1.msra.mxu0 0.0
        %717 = vmatprep.subr.mxu0 0.0
        %718 = vmatpush1.msra.mxu0 0.0
        %719 = vmatprep.subr.mxu0 0.0
        %720 = vmatpush1.msra.mxu0 0.0
        %721 = vmatprep.subr.mxu0 0.0
        %722 = vmatpush1.msra.mxu0 0.0
        %723 = vmatprep.subr.mxu0 0.0
        %724 = vmatpush1.msra.mxu0 0.0
        %725 = vmatprep.subr.mxu0 0.0
        %726 = vmatpush1.msra.mxu0 0.0
        %727 = vmatprep.subr.mxu0 0.0
        %728 = vmatpush1.msra.mxu0 0.0
        %729 = vmatprep.subr.mxu0 0.0
        %730 = vmatpush1.msra.mxu0 0.0
        %731 = vmatprep.subr.mxu0 0.0
        %732 = vmatpush1.msra.mxu0 0.0
        %733 = vmatprep.subr.mxu0 0.0
        %734 = vmatpush1.msra.mxu0 0.0
        %735 = vmatprep.subr.mxu0 0.0
        %736 = vmatpush1.msra.mxu0 0.0
        %737 = vmatprep.subr.mxu0 0.0
        %738 = vmatpush1.msra.mxu0 0.0
        %739 = vmatprep.subr.mxu0 0.0
        %740 = vmatpush1.msra.mxu0 0.0
        %741 = vmatprep.subr.mxu0 0.0
        %742 = vmatpush1.msra.mxu0 0.0
        %743 = vmatprep.subr.mxu0 0.0
        %744 = vmatpush1.msra.mxu0 0.0
        %745 = vmatprep.subr.mxu0 0.0
        %746 = vmatpush1.msra.mxu0 0.0
        %747 = vmatprep.subr.mxu0 0.0
        %748 = vmatpush1.msra.mxu0 0.0
        %749 = vmatprep.subr.mxu0 0.0
        %750 = vmatpush1.msra.mxu0 0.0
        %751 = vmatprep.subr.mxu0 0.0
        %752 = vmatpush1.msra.mxu0 0.0
        %753 = vmatprep.subr.mxu0 0.0
        %754 = vmatpush1.msra.mxu0 0.0
        %755 = vmatprep.subr.mxu0 0.0
        %756 = vmatpush1.msra.mxu0 0.0
        %757 = vmatprep.subr.mxu0 0.0
        %758 = vmatpush1.msra.mxu0 0.0
        %759 = vmatprep.subr.mxu0 0.0
        %760 = vmatpush1.msra.mxu0 0.0
        %761 = vmatprep.subr.mxu0 0.0
        %762 = vmatpush1.msra.mxu0 0.0
        %763 = vmatprep.mubr.f32.mxu0 0.0
        %764 = vmatmul.mubr.f32.gmra.mrb[0].mxu0 %v697
        %v765 = vpop.f32.mrb[0].mxu0
        %v766 = vadd.f32 0.0, %v765
        %v767 = vpop.f32.mrb[0].mxu0
        %768 = vdwg.mxu0
        %v769 = vld [vmem:[%s4] sm:$0xff]
        %v770 = vld [vmem:[%s4 + $0x8] sm:$0xff]
        %v771 = vld [vmem:[%s4 + $0x10] sm:$0xff]
        %v772 = vld [vmem:[%s4 + $0x18] sm:$0xff]
        %773 = vmatprep.subr.mxu0 0.0
        %774 = vmatpush1.msra.mxu0 %v769
        %775 = vmatprep.subr.mxu0 0.0
        %776 = vmatpush1.msra.mxu0 %v770
        %777 = vmatprep.subr.mxu0 0.0
        %778 = vmatpush1.msra.mxu0 %v771
        %779 = vmatprep.subr.mxu0 0.0
        %780 = vmatpush1.msra.mxu0 %v772
        %781 = vmatprep.subr.mxu0 0.0
        %782 = vmatpush1.msra.mxu0 0.0
        %783 = vmatprep.subr.mxu0 0.0
        %784 = vmatpush1.msra.mxu0 0.0
        %785 = vmatprep.subr.mxu0 0.0
        %786 = vmatpush1.msra.mxu0 0.0
        %787 = vmatprep.subr.mxu0 0.0
        %788 = vmatpush1.msra.mxu0 0.0
        %789 = vmatprep.subr.mxu0 0.0
        %790 = vmatpush1.msra.mxu0 0.0
        %791 = vmatprep.subr.mxu0 0.0
        %792 = vmatpush1.msra.mxu0 0.0
        %793 = vmatprep.subr.mxu0 0.0
        %794 = vmatpush1.msra.mxu0 0.0
        %795 = vmatprep.subr.mxu0 0.0
        %796 = vmatpush1.msra.mxu0 0.0
        %797 = vmatprep.subr.mxu0 0.0
        %798 = vmatpush1.msra.mxu0 0.0
        %799 = vmatprep.subr.mxu0 0.0
        %800 = vmatpush1.msra.mxu0 0.0
        %801 = vmatprep.subr.mxu0 0.0
        %802 = vmatpush1.msra.mxu0 0.0
        %803 = vmatprep.subr.mxu0 0.0
        %804 = vmatpush1.msra.mxu0 0.0
        %805 = vmatprep.subr.mxu0 0.0
        %806 = vmatpush1.msra.mxu0 0.0
        %807 = vmatprep.subr.mxu0 0.0
        %808 = vmatpush1.msra.mxu0 0.0
        %809 = vmatprep.subr.mxu0 0.0
        %810 = vmatpush1.msra.mxu0 0.0
        %811 = vmatprep.subr.mxu0 0.0
        %812 = vmatpush1.msra.mxu0 0.0
        %813 = vmatprep.subr.mxu0 0.0
        %814 = vmatpush1.msra.mxu0 0.0
        %815 = vmatprep.subr.mxu0 0.0
        %816 = vmatpush1.msra.mxu0 0.0
        %817 = vmatprep.subr.mxu0 0.0
        %818 = vmatpush1.msra.mxu0 0.0
        %819 = vmatprep.subr.mxu0 0.0
        %820 = vmatpush1.msra.mxu0 0.0
        %821 = vmatprep.subr.mxu0 0.0
        %822 = vmatpush1.msra.mxu0 0.0
        %823 = vmatprep.subr.mxu0 0.0
        %824 = vmatpush1.msra.mxu0 0.0
        %825 = vmatprep.subr.mxu0 0.0
        %826 = vmatpush1.msra.mxu0 0.0
        %827 = vmatprep.subr.mxu0 0.0
        %828 = vmatpush1.msra.mxu0 0.0
        %829 = vmatprep.subr.mxu0 0.0
        %830 = vmatpush1.msra.mxu0 0.0
        %831 = vmatprep.subr.mxu0 0.0
        %832 = vmatpush1.msra.mxu0 0.0
        %833 = vmatprep.subr.mxu0 0.0
        %834 = vmatpush1.msra.mxu0 0.0
        %835 = vmatprep.subr.mxu0 0.0
        %836 = vmatpush1.msra.mxu0 0.0
        %837 = vmatprep.mubr.f32.mxu0 0.0
        %838 = vmatmul.mubr.f32.gmra.mrb[0].mxu0 %v697
        %v839 = vpop.f32.mrb[0].mxu0
        %v840 = vadd.f32 0.0, %v839
        %v841 = vpop.f32.mrb[0].mxu0
        %842 = vdwg.mxu0
        %v843 = vlaneseq
        %v844 = vshrl.u32 %v843, 7
        %v845 = vadd.s32 %v844, 8
        %v846 = vlaneseq
        %v847 = vand.u32 %v846, 127
        %v848 = vmul.u32 %v847, 8
        %vm849 = vcmp.ge.s32.totalorder %v844, %v848
        %vm850 = vcmp.ge.s32.totalorder %v845, %v848
        %v851 = vadd.s32 %v848, 8
        %vm852 = vcmp.lt.s32.totalorder %v844, %v851
        %vm853 = vcmp.lt.s32.totalorder %v845, %v851
        %vm854 = vmand %vm849, %vm852
        %vm855 = vmand %vm850, %vm853
        %v856 = vsel %vm854, 1, 0
        %v857 = vsel %vm855, 1, 0
        %v858 = vcvt.s32.f32 %v856
        %v859 = vcvt.s32.f32 %v857
        %vm860 = vcmask 15360
        %v862 = vsel %vm860, %v858, 0
        %v865 = vsel %vm860, %v859, 0
        %vm867 = vcmask 1041408
        %v869 = vsel %vm867, %v766, 0
        %871 = vmatprep.subr.mxu0 0.0
        %872 = vmatpush1.msra.mxu0 %v869
        %873 = vmatprep.subr.mxu0 0.0
        %874 = vmatpush1.msra.mxu0 0.0
        %875 = vmatprep.subr.mxu0 0.0
        %876 = vmatpush1.msra.mxu0 0.0
        %877 = vmatprep.subr.mxu0 0.0
        %878 = vmatpush1.msra.mxu0 0.0
        %879 = vmatprep.subr.mxu0 0.0
        %880 = vmatpush1.msra.mxu0 0.0
        %881 = vmatprep.subr.mxu0 0.0
        %882 = vmatpush1.msra.mxu0 0.0
        %883 = vmatprep.subr.mxu0 0.0
        %884 = vmatpush1.msra.mxu0 0.0
        %885 = vmatprep.subr.mxu0 0.0
        %886 = vmatpush1.msra.mxu0 0.0
        %887 = vmatprep.subr.mxu0 0.0
        %888 = vmatpush1.msra.mxu0 0.0
        %889 = vmatprep.subr.mxu0 0.0
        %890 = vmatpush1.msra.mxu0 0.0
        %891 = vmatprep.subr.mxu0 0.0
        %892 = vmatpush1.msra.mxu0 0.0
        %893 = vmatprep.subr.mxu0 0.0
        %894 = vmatpush1.msra.mxu0 0.0
        %895 = vmatprep.subr.mxu0 0.0
        %896 = vmatpush1.msra.mxu0 0.0
        %897 = vmatprep.subr.mxu0 0.0
        %898 = vmatpush1.msra.mxu0 0.0
        %899 = vmatprep.subr.mxu0 0.0
        %900 = vmatpush1.msra.mxu0 0.0
        %901 = vmatprep.subr.mxu0 0.0
        %902 = vmatpush1.msra.mxu0 0.0
        %903 = vmatprep.subr.mxu0 0.0
        %904 = vmatpush1.msra.mxu0 0.0
        %905 = vmatprep.subr.mxu0 0.0
        %906 = vmatpush1.msra.mxu0 0.0
        %907 = vmatprep.subr.mxu0 0.0
        %908 = vmatpush1.msra.mxu0 0.0
        %909 = vmatprep.subr.mxu0 0.0
        %910 = vmatpush1.msra.mxu0 0.0
        %911 = vmatprep.subr.mxu0 0.0
        %912 = vmatpush1.msra.mxu0 0.0
        %913 = vmatprep.subr.mxu0 0.0
        %914 = vmatpush1.msra.mxu0 0.0
        %915 = vmatprep.subr.mxu0 0.0
        %916 = vmatpush1.msra.mxu0 0.0
        %917 = vmatprep.subr.mxu0 0.0
        %918 = vmatpush1.msra.mxu0 0.0
        %919 = vmatprep.subr.mxu0 0.0
        %920 = vmatpush1.msra.mxu0 0.0
        %921 = vmatprep.subr.mxu0 0.0
        %922 = vmatpush1.msra.mxu0 0.0
        %923 = vmatprep.subr.mxu0 0.0
        %924 = vmatpush1.msra.mxu0 0.0
        %925 = vmatprep.subr.mxu0 0.0
        %926 = vmatpush1.msra.mxu0 0.0
        %927 = vmatprep.subr.mxu0 0.0
        %928 = vmatpush1.msra.mxu0 0.0
        %929 = vmatprep.subr.mxu0 0.0
        %930 = vmatpush1.msra.mxu0 0.0
        %931 = vmatprep.subr.mxu0 0.0
        %932 = vmatpush1.msra.mxu0 0.0
        %933 = vmatprep.subr.mxu0 0.0
        %934 = vmatpush1.msra.mxu0 0.0
        %935 = vmatprep.mubr.f32.mxu0 0.0
        %936 = vmatmul.mubr.f32.gmra.mrb[0].mxu0 %v862
        %v937 = vpop.f32.mrb[0].mxu0
        %v938 = vadd.f32 0.0, %v937
        %v939 = vpop.f32.mrb[0].mxu0
        %940 = vmatprep.mubr.f32.mxu0 0.0
        %941 = vmatmul.mubr.f32.gmra.mrb[0].mxu0 %v865
        %v942 = vpop.f32.mrb[0].mxu0
        %v943 = vadd.f32 0.0, %v942
        %v944 = vpop.f32.mrb[0].mxu0
        %945 = vdwg.mxu0
        %v947 = vsel %vm867, %v840, 0
        %949 = vmatprep.subr.mxu0 0.0
        %950 = vmatpush1.msra.mxu0 %v947
        %951 = vmatprep.subr.mxu0 0.0
        %952 = vmatpush1.msra.mxu0 0.0
        %953 = vmatprep.subr.mxu0 0.0
        %954 = vmatpush1.msra.mxu0 0.0
        %955 = vmatprep.subr.mxu0 0.0
        %956 = vmatpush1.msra.mxu0 0.0
        %957 = vmatprep.subr.mxu0 0.0
        %958 = vmatpush1.msra.mxu0 0.0
        %959 = vmatprep.subr.mxu0 0.0
        %960 = vmatpush1.msra.mxu0 0.0
        %961 = vmatprep.subr.mxu0 0.0
        %962 = vmatpush1.msra.mxu0 0.0
        %963 = vmatprep.subr.mxu0 0.0
        %964 = vmatpush1.msra.mxu0 0.0
        %965 = vmatprep.subr.mxu0 0.0
        %966 = vmatpush1.msra.mxu0 0.0
        %967 = vmatprep.subr.mxu0 0.0
        %968 = vmatpush1.msra.mxu0 0.0
        %969 = vmatprep.subr.mxu0 0.0
        %970 = vmatpush1.msra.mxu0 0.0
        %971 = vmatprep.subr.mxu0 0.0
        %972 = vmatpush1.msra.mxu0 0.0
        %973 = vmatprep.subr.mxu0 0.0
        %974 = vmatpush1.msra.mxu0 0.0
        %975 = vmatprep.subr.mxu0 0.0
        %976 = vmatpush1.msra.mxu0 0.0
        %977 = vmatprep.subr.mxu0 0.0
        %978 = vmatpush1.msra.mxu0 0.0
        %979 = vmatprep.subr.mxu0 0.0
        %980 = vmatpush1.msra.mxu0 0.0
        %981 = vmatprep.subr.mxu0 0.0
        %982 = vmatpush1.msra.mxu0 0.0
        %983 = vmatprep.subr.mxu0 0.0
        %984 = vmatpush1.msra.mxu0 0.0
        %985 = vmatprep.subr.mxu0 0.0
        %986 = vmatpush1.msra.mxu0 0.0
        %987 = vmatprep.subr.mxu0 0.0
        %988 = vmatpush1.msra.mxu0 0.0
        %989 = vmatprep.subr.mxu0 0.0
        %990 = vmatpush1.msra.mxu0 0.0
        %991 = vmatprep.subr.mxu0 0.0
        %992 = vmatpush1.msra.mxu0 0.0
        %993 = vmatprep.subr.mxu0 0.0
        %994 = vmatpush1.msra.mxu0 0.0
        %995 = vmatprep.subr.mxu0 0.0
        %996 = vmatpush1.msra.mxu0 0.0
        %997 = vmatprep.subr.mxu0 0.0
        %998 = vmatpush1.msra.mxu0 0.0
        %999 = vmatprep.subr.mxu0 0.0
        %1000 = vmatpush1.msra.mxu0 0.0
        %1001 = vmatprep.subr.mxu0 0.0
        %1002 = vmatpush1.msra.mxu0 0.0
        %1003 = vmatprep.subr.mxu0 0.0
        %1004 = vmatpush1.msra.mxu0 0.0
        %1005 = vmatprep.subr.mxu0 0.0
        %1006 = vmatpush1.msra.mxu0 0.0
        %1007 = vmatprep.subr.mxu0 0.0
        %1008 = vmatpush1.msra.mxu0 0.0
        %1009 = vmatprep.subr.mxu0 0.0
        %1010 = vmatpush1.msra.mxu0 0.0
        %1011 = vmatprep.subr.mxu0 0.0
        %1012 = vmatpush1.msra.mxu0 0.0
        %1013 = vmatprep.mubr.f32.mxu0 0.0
        %1014 = vmatmul.mubr.f32.gmra.mrb[0].mxu0 %v862
        %v1015 = vpop.f32.mrb[0].mxu0
        %v1016 = vadd.f32 0.0, %v1015
        %v1017 = vpop.f32.mrb[0].mxu0
        %1018 = vmatprep.mubr.f32.mxu0 0.0
        %1019 = vmatmul.mubr.f32.gmra.mrb[0].mxu0 %v865
        %v1020 = vpop.f32.mrb[0].mxu0
        %v1021 = vadd.f32 0.0, %v1020
        %v1022 = vpop.f32.mrb[0].mxu0
        %1023 = vdwg.mxu0
        %v1024 = vmul.f32 %v539, %v938
        %v1025 = vmul.f32 %v544, %v943
        %v1026 = vsel %vm467, %v1024, 0.0
        %1027 = vadd.xlane.f32.xlu0 %v1026
        %v1028 = vpop.xlane.xlu0 %1027
        %v1029 = vsel %vm467, %v1025, 0.0
        %1030 = vadd.xlane.f32.xlu0 %v1029
        %v1031 = vpop.xlane.xlu0 %1030
        %v1032 = vmul.f32 %v1028, 0.17677669
        %v1033 = vmul.f32 %v1031, 0.17677669
        %v1034 = vxor.u32 %v1032, 2147483648
        %v1035 = vxor.u32 %v1033, 2147483648
        %v1036 = vmul.f32 %v1034, 1.442695
        %v1037 = vpow.pop %v1036
        %v1038 = vmul.f32 %v1035, 1.442695
        %v1039 = vpow.pop %v1038
        %v1040 = vadd.f32 %v1037, 1.0
        %v1041 = vadd.f32 %v1039, 1.0
        %v1042 = vrcp.pop %v1040
        %v1043 = vmul.f32 1.0, %v1042
        %v1044 = vrcp.pop %v1041
        %v1045 = vmul.f32 1.0, %v1044
        %v1046 = vmul.f32 %v1043, %v1016
        %v1047 = vmul.f32 %v1045, %v1021
        %v1048 = vld [vmem:[#allocation2] sm:$0xff]
        %v1049 = vld [vmem:[#allocation2 + $0x8] sm:$0xff]
        %v1050 = vld [vmem:[#allocation2 + $0x10] sm:$0xff]
        %v1051 = vld [vmem:[#allocation2 + $0x18] sm:$0xff]
        %v1052 = vld [vmem:[%s6] sm:$0x1]
        %v1054 = vlaneseq
        %v1055 = vshrl.u32 %v1054, 7
        %v1056 = vsub.s32 0, %v1055
        %v1057 = vrot.slane %v1052, %v1056
        %v1060 = vsel %vm467, %v1046, 0
        %v1063 = vsel %vm467, %v1047, 0
        %1065 = vmatprep.subr.mxu0 0.0
        %1066 = vmatpush1.msra.mxu0 %v1048
        %1067 = vmatprep.subr.mxu0 0.0
        %1068 = vmatpush1.msra.mxu0 %v1049
        %1069 = vmatprep.subr.mxu0 0.0
        %1070 = vmatpush1.msra.mxu0 %v1050
        %1071 = vmatprep.subr.mxu0 0.0
        %1072 = vmatpush1.msra.mxu0 %v1051
        %1073 = vmatprep.subr.mxu0 0.0
        %1074 = vmatpush1.msra.mxu0 0.0
        %1075 = vmatprep.subr.mxu0 0.0
        %1076 = vmatpush1.msra.mxu0 0.0
        %1077 = vmatprep.subr.mxu0 0.0
        %1078 = vmatpush1.msra.mxu0 0.0
        %1079 = vmatprep.subr.mxu0 0.0
        %1080 = vmatpush1.msra.mxu0 0.0
        %1081 = vmatprep.subr.mxu0 0.0
        %1082 = vmatpush1.msra.mxu0 0.0
        %1083 = vmatprep.subr.mxu0 0.0
        %1084 = vmatpush1.msra.mxu0 0.0
        %1085 = vmatprep.subr.mxu0 0.0
        %1086 = vmatpush1.msra.mxu0 0.0
        %1087 = vmatprep.subr.mxu0 0.0
        %1088 = vmatpush1.msra.mxu0 0.0
        %1089 = vmatprep.subr.mxu0 0.0
        %1090 = vmatpush1.msra.mxu0 0.0
        %1091 = vmatprep.subr.mxu0 0.0
        %1092 = vmatpush1.msra.mxu0 0.0
        %1093 = vmatprep.subr.mxu0 0.0
        %1094 = vmatpush1.msra.mxu0 0.0
        %1095 = vmatprep.subr.mxu0 0.0
        %1096 = vmatpush1.msra.mxu0 0.0
        %1097 = vmatprep.subr.mxu0 0.0
        %1098 = vmatpush1.msra.mxu0 0.0
        %1099 = vmatprep.subr.mxu0 0.0
        %1100 = vmatpush1.msra.mxu0 0.0
        %1101 = vmatprep.subr.mxu0 0.0
        %1102 = vmatpush1.msra.mxu0 0.0
        %1103 = vmatprep.subr.mxu0 0.0
        %1104 = vmatpush1.msra.mxu0 0.0
        %1105 = vmatprep.subr.mxu0 0.0
        %1106 = vmatpush1.msra.mxu0 0.0
        %1107 = vmatprep.subr.mxu0 0.0
        %1108 = vmatpush1.msra.mxu0 0.0
        %1109 = vmatprep.subr.mxu0 0.0
        %1110 = vmatpush1.msra.mxu0 0.0
        %1111 = vmatprep.subr.mxu0 0.0
        %1112 = vmatpush1.msra.mxu0 0.0
        %1113 = vmatprep.subr.mxu0 0.0
        %1114 = vmatpush1.msra.mxu0 0.0
        %1115 = vmatprep.subr.mxu0 0.0
        %1116 = vmatpush1.msra.mxu0 0.0
        %1117 = vmatprep.subr.mxu0 0.0
        %1118 = vmatpush1.msra.mxu0 0.0
        %1119 = vmatprep.subr.mxu0 0.0
        %1120 = vmatpush1.msra.mxu0 0.0
        %1121 = vmatprep.subr.mxu0 0.0
        %1122 = vmatpush1.msra.mxu0 0.0
        %1123 = vmatprep.subr.mxu0 0.0
        %1124 = vmatpush1.msra.mxu0 0.0
        %1125 = vmatprep.subr.mxu0 0.0
        %1126 = vmatpush1.msra.mxu0 0.0
        %1127 = vmatprep.subr.mxu0 0.0
        %1128 = vmatpush1.msra.mxu0 0.0
        %1129 = vmatprep.mubr.f32.mxu0 0.0
        %1130 = vmatmul.mubr.f32.gmra.mrb[0].mxu0 %v1060
        %v1131 = vpop.f32.mrb[0].mxu0
        %v1132 = vadd.f32 %v1057, %v1131
        %v1133 = vpop.f32.mrb[0].mxu0
        %1134 = vmatprep.mubr.f32.mxu0 0.0
        %1135 = vmatmul.mubr.f32.gmra.mrb[0].mxu0 %v1063
        %v1136 = vpop.f32.mrb[0].mxu0
        %v1137 = vadd.f32 %v1057, %v1136
        %v1138 = vpop.f32.mrb[0].mxu0
        %1139 = vdwg.mxu0
        %v1144 = vrot.slane %v373, 1
        %v1145 = vrot.slane %v374, 1
        %v1146 = vsel %vm456, %v1144, %v1145
        %v1147 = vrot.slane %v375, 1
        %v1148 = vrot.slane %v376, 1
        %v1149 = vsel %vm456, %v1147, %v1148
        %v1152 = vadd.f32 %v1132, %v1146
        %v1153 = vadd.f32 %v1137, %v1149
        %1154 = vst.msk [vmem:[%s357] sm:$0xff] %vm467, %v1152
        %1155 = vst.msk [vmem:[%s357 + $0x8] sm:$0xff] %vm467, %v1153
        %s1156 = sand.u32 %s231, 1
        %s1157 = scalar_lea.sflag [#allocation4], %s1156
        %s1158 = sand.u32 %s231, 1
        %s1159 = smul.addr %s1158, 16
        %s1160 = scalar_lea.vmem [#allocation5], %s1159
        // Predicated region
        $region61: #{tpu_custom_call.1} parent=55 // pred_check
          %p1161 = pneg %p241
        $region62: #{tpu_custom_call.1} parent=55 // pred_check_branch
          %1163 = sbr.rel (%p1161) target = $region64
        $region63: #{tpu_custom_call.1} parent=55 // pred_region
          %s1164 = smul.u32 2, %s24
          %s1166 = ssub.s32 256, 256
          %1167 = vsyncadd %s1157, %s1166
          %s1168 = smul.addr %s1164, 128
          %s1169 = scalar_lea.hbm %s9, %s1168
          %s1170 = sshll.u32 %s1160, 4
          %s1171 = int_to_ptr.vmem [resolvable:$true] %s1170
          %1176 = dma.vmem_to_hbm [thread:$0]  %s1171, 256, %s1169, %s1157, 128, 128, 8
        $region64: #{tpu_custom_call.1} parent=55 // pred_fallthru
          _
      $region56: #{tpu_custom_call.1} parent=5 // pred_fallthru
        _
      %p1177 = scmp.le.s32.totalorder 2, %s19
      // Predicated region
      $region65: #{tpu_custom_call.1} parent=5 // pred_check
        %p1178 = pneg %p1177
      $region66: #{tpu_custom_call.1} parent=5 // pred_check_branch
        %1180 = sbr.rel (%p1178) target = $region68
      $region67: #{tpu_custom_call.1} parent=5 // pred_region
        %s1181 = ssub.s32 %s19, 2
        // Predicated region
        $region69: #{tpu_custom_call.1} parent=67 // pred_check
          %p1182 = pneg %p247
        $region70: #{tpu_custom_call.1} parent=67 // pred_check_branch
          %1184 = sbr.rel (%p1182) target = $region72
        $region71: #{tpu_custom_call.1} parent=67 // pred_region
          %s1185 = sand.u32 %s232, 1
          %s1186 = scalar_lea.sflag [#allocation4], %s1185
          %s1187 = sand.u32 %s232, 1
          %s1188 = smul.addr %s1187, 16
          %s1189 = scalar_lea.vmem [#allocation5], %s1188
          %1190 = dma.done %s1186, 256
        $region72: #{tpu_custom_call.1} parent=67 // pred_fallthru
          _
      $region68: #{tpu_custom_call.1} parent=5 // pred_fallthru
        _
    $region6: #{tpu_custom_call.1} parent=1 // loop_footer
      %s23 = sadd.s32 1, %s19
    $region7: #{tpu_custom_call.1} parent=1 // loop_footer_branch
      %18 = sbr.rel target = $region3
    $region8: #{tpu_custom_call.1} parent=1 // loop_exit
      _
    %1191 = vsyncpa [#allocation3], 1
    %s1192 = scalar_lea.sflag [#allocation3], 1
    %1193 = vsyncpa %s1192, 1
    %1194 = vsyncpa [#allocation4], 1
    %s1195 = scalar_lea.sflag [#allocation4], 1
    %1196 = vsyncpa %s1195, 1

</llo_original>
